<compile_context>
chip_gen: v6e
topology: v6e:2x2x1
jax: 0.10.0
libtpu: 0.0.40
codegen_flags: <defaults>
</compile_context>

<pallas_src>
import functools

import jax
import jax.numpy as jnp
from jax.experimental import pallas as pl
from jax.experimental.pallas import tpu as pltpu


# --------------------------------------------------------------------------
# pass 1: fused QKV projection (x is read exactly once, q/k/v stored bf16)
# --------------------------------------------------------------------------
def _qkv_proj_kernel(x_ref, w_ref, b_ref, q_ref, k_ref, v_ref, *, crp):
    x = x_ref[0].astype(jnp.bfloat16)                                # (T, C)
    qkv = jnp.dot(x, w_ref[...],
                  preferred_element_type=jnp.float32) + b_ref[...]  # (T, D) f32
    # 128-lane aligned slices (Crp / Cp are multiples of 128 -> free views).
    q_ref[0] = qkv[:, :crp].astype(jnp.bfloat16)
    k_ref[0] = qkv[:, crp:2 * crp].astype(jnp.bfloat16)
    v_ref[0] = qkv[:, 2 * crp:].astype(jnp.bfloat16)


# --------------------------------------------------------------------------
# pass 2: flash-style attention + gamma-scaled residual
# --------------------------------------------------------------------------
def _flash_attn_kernel(gamma_ref, q_ref, k_ref, v_ref, xres_ref, o_ref,
                       m_sc, l_sc, acc_sc, *, c):
    kv_it = pl.program_id(2)

    @pl.when(kv_it == 0)
    def _init():
        m_sc[...] = jnp.full_like(m_sc, -jnp.inf)
        l_sc[...] = jnp.zeros_like(l_sc)
        acc_sc[...] = jnp.zeros_like(acc_sc)

    q = q_ref[0]                                                     # (T, Crp) bf16
    k = k_ref[0]                                                     # (T, Crp) bf16
    v = v_ref[0]                                                     # (T, Cp)  bf16

    # Scores: contract the channel axis of q and k directly (no transpose op).
    s = jax.lax.dot_general(q, k, (((1,), (1,)), ((), ())),
                            preferred_element_type=jnp.float32)      # (T, T) f32

    # Online-softmax update.
    m_prev = m_sc[...]
    m_new = jnp.maximum(m_prev, jnp.max(s, axis=-1, keepdims=True))
    alpha = jnp.exp(m_prev - m_new)
    p = jnp.exp(s - m_new)
    l_sc[...] = alpha * l_sc[...] + jnp.sum(p, axis=-1, keepdims=True)
    acc_sc[...] = alpha * acc_sc[...] + jnp.dot(
        p.astype(jnp.bfloat16), v, preferred_element_type=jnp.float32)
    m_sc[...] = m_new

    @pl.when(kv_it == pl.num_programs(2) - 1)
    def _finalize():
        # Normalize the (T, C) accumulator instead of the (T, TKV) prob matrix.
        inv_l = pl.reciprocal(l_sc[...], approx=True)
        out = acc_sc[...][:, :c] * inv_l                              # drop zero pad
        gamma = gamma_ref[0]                                          # scalar (SMEM)
        o_ref[0] = (gamma * out + xres_ref[0]).astype(o_ref.dtype)
    # TODO(synk): PyTorch also stashes `attention_map` (detached (HW,HW) softmax)
    # as a module attribute; the flash formulation never materializes it and
    # forward() only returns `out`.


# --------------------------------------------------------------------------
# tiling helpers (generation-aware)
# --------------------------------------------------------------------------
def _round_up(n, m):
    return ((n + m - 1) // m) * m


def _vmem_capacity_bytes():
    """Best-effort VMEM capacity query; conservative (v7x) 64 MiB fallback."""
    try:
        info = pltpu.get_tpu_info()
        for name in ("vmem_capacity_bytes", "vmem_size_bytes"):
            cap = getattr(info, name, None)
            if cap:
                return int(cap)
    except Exception:
        pass
    return 64 * 1024 * 1024


def _attn_vmem_bytes(t, c, crp, cp):
    """Rough per-step VMEM footprint of the attention pass (double buffered)."""
    b = 0
    b += 2 * t * crp * 2 * 2          # q + k tiles (bf16, double buffered)
    b += 2 * t * cp * 2               # v tile (bf16, double buffered)
    b += 2 * t * c * 4                # residual x tile (f32)
    b += 2 * t * c * 4                # output tile (f32)
    b += t * cp * 4 + 2 * t * 4       # acc / m / l scratch
    b += t * t * 4 + t * t * 2 + t * cp * 4   # score / prob / pv transients
    return b


def _pick_block(hw, batch, budget, c, crp, cp):
    """Largest row tile that divides hw, fits the VMEM budget, prefers
    multiples of 256 (MXU fill) and keeps >= 2 parallel grid steps."""
    cands = sorted({t for t in range(16, hw + 1, 16) if hw % t == 0},
                   reverse=True)
    if not cands:
        return hw
    fits = [t for t in cands if _attn_vmem_bytes(t, c, crp, cp) <= budget]
    if not fits:
        return cands[-1]
    t = fits[0]
    for mult in (256, 128):
        aligned = [s for s in fits if s % mult == 0]
        if aligned:
            t = aligned[0]
            break
    # v7x has 2 TensorCores: make sure the parallel extent B*n_t >= 2.
    if batch * (hw // t) < 2:
        smaller = [s for s in fits if s < t and batch * (hw // s) >= 2]
        if smaller:
            t = smaller[0]
    return t


def _pad_cols(w, b, cols):
    c_in, c_out = w.shape
    wp = jnp.zeros((c_in, cols), w.dtype).at[:, :c_out].set(w)
    bp = jnp.zeros((1, cols), b.dtype).at[:, :c_out].set(b)
    return wp, bp


# --------------------------------------------------------------------------
# wrapper
# --------------------------------------------------------------------------
def self_attention(x_nchw, params, *, block_rows=None):
    """x_nchw: (B, C, H, W) float32.  Returns (B, C, H, W)."""
    B, C, H, W = x_nchw.shape
    HW = H * W
    Cr = params["wq"].shape[1]
    Crp = _round_up(max(Cr, 1), 128)         # lane-aligned q/k width
    Cp = _round_up(C, 128)                   # lane-aligned v width
    D = 2 * Crp + Cp

    # Fused, zero-padded, lane-aligned QKV weight / bias.
    wq_p, bq_p = _pad_cols(params["wq"], params["bq"], Crp)
    wk_p, bk_p = _pad_cols(params["wk"], params["bk"], Crp)
    wv_p, bv_p = _pad_cols(params["wv"], params["bv"], Cp)
    wqkv = jnp.concatenate([wq_p, wk_p, wv_p], axis=1).astype(jnp.bfloat16)
    bqkv = jnp.concatenate([bq_p, bk_p, bv_p], axis=1).astype(jnp.float32)

    # NCHW -> (B, HW, C): channels on the lane axis, spatial on sublanes.
    x = jnp.transpose(x_nchw.reshape(B, C, HW), (0, 2, 1))

    cap = _vmem_capacity_bytes()
    if block_rows is not None:
        T = block_rows
    else:
        T = _pick_block(HW, B, cap // 2, C, Crp, Cp)
    assert HW % T == 0 and (T == HW or T % 16 == 0), "bad row-tile size"
    n_t = HW // T

    vmem_limit = int(min(max(32 * 1024 * 1024, cap * 3 // 4), 96 * 1024 * 1024))

    # ---- pass 1: fused QKV projection (x read once, q/k/v stored bf16) ----
    q, k, v = pl.pallas_call(
        functools.partial(_qkv_proj_kernel, crp=Crp),
        out_shape=(jax.ShapeDtypeStruct((B, HW, Crp), jnp.bfloat16),
                   jax.ShapeDtypeStruct((B, HW, Crp), jnp.bfloat16),
                   jax.ShapeDtypeStruct((B, HW, Cp), jnp.bfloat16)),
        grid=(B, n_t),
        in_specs=[
            pl.BlockSpec((1, T, C), lambda b, i: (b, i, 0)),      # x rows
            pl.BlockSpec((C, D), lambda b, i: (0, 0)),            # fused weight
            pl.BlockSpec((1, D), lambda b, i: (0, 0)),            # fused bias
        ],
        out_specs=(pl.BlockSpec((1, T, Crp), lambda b, i: (b, i, 0)),
                   pl.BlockSpec((1, T, Crp), lambda b, i: (b, i, 0)),
                   pl.BlockSpec((1, T, Cp), lambda b, i: (b, i, 0))),
        compiler_params=pltpu.CompilerParams(
            dimension_semantics=("parallel", "parallel"),
            vmem_limit_bytes=vmem_limit),
    )(x, wqkv, bqkv)

    # ---- pass 2: flash attention + gamma-scaled residual ----
    out = pl.pallas_call(
        functools.partial(_flash_attn_kernel, c=C),
        out_shape=jax.ShapeDtypeStruct((B, HW, C), x.dtype),
        grid=(B, n_t, n_t),
        in_specs=[
            pl.BlockSpec(memory_space=pltpu.MemorySpace.SMEM),               # gamma (1,)
            pl.BlockSpec((1, T, Crp), lambda b, qi, kv: (b, qi, 0)),         # q tile
            pl.BlockSpec((1, T, Crp), lambda b, qi, kv: (b, kv, 0)),         # k tile
            pl.BlockSpec((1, T, Cp), lambda b, qi, kv: (b, kv, 0)),          # v tile
            pl.BlockSpec((1, T, C), lambda b, qi, kv: (b, qi, 0)),           # residual x
        ],
        out_specs=pl.BlockSpec((1, T, C), lambda b, qi, kv: (b, qi, 0)),
        scratch_shapes=[
            pltpu.VMEM((T, 1), jnp.float32),      # running max m
            pltpu.VMEM((T, 1), jnp.float32),      # running denom l
            pltpu.VMEM((T, Cp), jnp.float32),     # output accumulator
        ],
        compiler_params=pltpu.CompilerParams(
            dimension_semantics=("parallel", "parallel", "arbitrary"),
            vmem_limit_bytes=vmem_limit),
    )(params["gamma"], q, k, v, x)

    # (B, HW, C) -> NCHW
    return jnp.transpose(out, (0, 2, 1)).reshape(B, C, H, W)


# --------------------------------------------------------------------------
# pure-JAX reference (replicates the PyTorch forward in f32)
# --------------------------------------------------------------------------
def _reference(x, params):
    B, C, H, W = x.shape
    HW = H * W
    xf = x.reshape(B, C, HW)                                            # (B, C, HW)
    q = jnp.einsum("bci,co->bio", xf, params["wq"]) + params["bq"]      # (B, HW, Cr)
    k = jnp.einsum("bci,co->bio", xf, params["wk"]) + params["bk"]
    v = jnp.einsum("bci,co->bio", xf, params["wv"]) + params["bv"]      # (B, HW, C)
    att = jax.nn.softmax(jnp.einsum("bic,bjc->bij", q, k), axis=-1)
    out = jnp.einsum("bij,bjc->bic", att, v)                            # (B, HW, C)
    out = jnp.transpose(out, (0, 2, 1)).reshape(B, C, H, W)
    return params["gamma"][0] * out + x


def init_params(key, channels, reduction_ratio=8):
    cr = channels // reduction_ratio
    ks = jax.random.split(key, 6)
    s_in = 1.0 / jnp.sqrt(channels)
    # Conv2d(C, Cout, 1) weight is (Cout, Cin, 1, 1); stored pre-transposed as
    # (Cin, Cout) so the kernel computes x @ W directly.
    return {
        "wq": jax.random.uniform(ks[0], (channels, cr), jnp.float32, -s_in, s_in),
        "bq": jax.random.uniform(ks[1], (1, cr), jnp.float32, -s_in, s_in),
        "wk": jax.random.uniform(ks[2], (channels, cr), jnp.float32, -s_in, s_in),
        "bk": jax.random.uniform(ks[3], (1, cr), jnp.float32, -s_in, s_in),
        "wv": jax.random.uniform(ks[4], (channels, channels), jnp.float32, -s_in, s_in),
        "bv": jax.random.uniform(ks[5], (1, channels), jnp.float32, -s_in, s_in),
        # PyTorch init is gamma=0 (forward == identity); use a non-zero value
        # so the attention path is actually exercised.
        "gamma": jnp.array([0.5], dtype=jnp.float32),
    }


if __name__ == "__main__":
    B, C, H, W = 2, 32, 16, 16        # channels divisible by reduction_ratio=8
    key = jax.random.PRNGKey(0)
    k_x, k_p = jax.random.split(key)
    x = jax.random.normal(k_x, (B, C, H, W), dtype=jnp.float32)
    params = init_params(k_p, C, reduction_ratio=8)

    # block_rows=64 -> attention grid (2, 4, 4): exercises the multi-tile
    # online-softmax path (auto-picked tiles would be a single 256-row tile).
    out = self_attention(x, params, block_rows=64)
    out = jax.block_until_ready(out)

    ref = _reference(x, params)
    assert out.shape == (B, C, H, W)
    max_err = float(jnp.max(jnp.abs(out - ref)))
    assert jnp.allclose(out, ref, atol=2e-2, rtol=2e-2), (
        f"mismatch vs reference (max abs err {max_err})")
    print("KERNEL_OK")
</pallas_src>

<mosaic_0001>
module attributes {stable_mosaic.version = 11 : i64} {
  func.func @_qkv_proj_kernel(%arg0: i32, %arg1: i32, %arg2: memref<1x64x32xf32, #tpu.memory_space<vmem>>, %arg3: memref<32x384xbf16, #tpu.memory_space<vmem>>, %arg4: memref<1x384xf32, #tpu.memory_space<vmem>>, %arg5: memref<1x64x128xbf16, #tpu.memory_space<vmem>>, %arg6: memref<1x64x128xbf16, #tpu.memory_space<vmem>>, %arg7: memref<1x64x128xbf16, #tpu.memory_space<vmem>>) attributes {dimension_semantics = [#tpu.dimension_semantics<parallel>, #tpu.dimension_semantics<parallel>], iteration_bounds = array<i64: 2, 4>, scalar_prefetch = 0 : i64, scratch_operands = 0 : i64, tpu.core_type = #tpu.core_type<tc>, window_params = [{transform_indices = @transform_0, window_bounds = array<i64: 1, 64, 32>}, {pipeline_mode = #tpu.pipeline_mode<synchronous>, transform_indices = @transform_1, window_bounds = array<i64: 32, 384>}, {pipeline_mode = #tpu.pipeline_mode<synchronous>, transform_indices = @transform_2, window_bounds = array<i64: 1, 384>}, {transform_indices = @transform_3, window_bounds = array<i64: 1, 64, 128>}, {transform_indices = @transform_4, window_bounds = array<i64: 1, 64, 128>}, {transform_indices = @transform_5, window_bounds = array<i64: 1, 64, 128>}]} {
    %c0 = arith.constant 0 : index
    %c0_0 = arith.constant 0 : index
    %c0_1 = arith.constant 0 : index
    %0 = vector.load %arg2[%c0, %c0_0, %c0_1] : memref<1x64x32xf32, #tpu.memory_space<vmem>>, vector<1x64x32xf32>
    %1 = vector.shape_cast %0 : vector<1x64x32xf32> to vector<64x32xf32>
    %2 = arith.truncf %1 : vector<64x32xf32> to vector<64x32xbf16>
    %c0_2 = arith.constant 0 : index
    %c0_3 = arith.constant 0 : index
    %3 = vector.load %arg3[%c0_2, %c0_3] : memref<32x384xbf16, #tpu.memory_space<vmem>>, vector<32x384xbf16>
    %cst = arith.constant dense<0.000000e+00> : vector<64x384xf32>
    %4 = tpu.matmul %2, %3, %cst {dimension_numbers = #tpu.dot_dimension_numbers<[1], [0], [0], [1], [0, 0, 1, 1], [], []>} : vector<64x32xbf16>, vector<32x384xbf16>, vector<64x384xf32> -> vector<64x384xf32>
    %c0_4 = arith.constant 0 : index
    %c0_5 = arith.constant 0 : index
    %5 = vector.load %arg4[%c0_4, %c0_5] : memref<1x384xf32, #tpu.memory_space<vmem>>, vector<1x384xf32>
    %6 = vector.broadcast %5 : vector<1x384xf32> to vector<64x384xf32>
    %7 = arith.addf %4, %6 : vector<64x384xf32>
    %8 = vector.extract_strided_slice %7 {offsets = [0, 0], sizes = [64, 128], strides = [1, 1]} : vector<64x384xf32> to vector<64x128xf32>
    %9 = arith.truncf %8 : vector<64x128xf32> to vector<64x128xbf16>
    %c0_6 = arith.constant 0 : index
    %c0_7 = arith.constant 0 : index
    %c0_8 = arith.constant 0 : index
    %10 = vector.load %arg5[%c0_6, %c0_7, %c0_8] : memref<1x64x128xbf16, #tpu.memory_space<vmem>>, vector<1x64x128xbf16>
    %11 = vector.shape_cast %10 : vector<1x64x128xbf16> to vector<64x128xbf16>
    %12 = vector.shape_cast %9 : vector<64x128xbf16> to vector<1x64x128xbf16>
    tpu.vector_store %arg5[%c0_6, %c0_7, %c0_8], %12 {strides = array<i32>} : memref<1x64x128xbf16, #tpu.memory_space<vmem>>, vector<1x64x128xbf16>,
    %13 = vector.extract_strided_slice %7 {offsets = [0, 128], sizes = [64, 128], strides = [1, 1]} : vector<64x384xf32> to vector<64x128xf32>
    %14 = arith.truncf %13 : vector<64x128xf32> to vector<64x128xbf16>
    %c0_9 = arith.constant 0 : index
    %c0_10 = arith.constant 0 : index
    %c0_11 = arith.constant 0 : index
    %15 = vector.load %arg6[%c0_9, %c0_10, %c0_11] : memref<1x64x128xbf16, #tpu.memory_space<vmem>>, vector<1x64x128xbf16>
    %16 = vector.shape_cast %15 : vector<1x64x128xbf16> to vector<64x128xbf16>
    %17 = vector.shape_cast %14 : vector<64x128xbf16> to vector<1x64x128xbf16>
    tpu.vector_store %arg6[%c0_9, %c0_10, %c0_11], %17 {strides = array<i32>} : memref<1x64x128xbf16, #tpu.memory_space<vmem>>, vector<1x64x128xbf16>,
    %18 = vector.extract_strided_slice %7 {offsets = [0, 256], sizes = [64, 128], strides = [1, 1]} : vector<64x384xf32> to vector<64x128xf32>
    %19 = arith.truncf %18 : vector<64x128xf32> to vector<64x128xbf16>
    %c0_12 = arith.constant 0 : index
    %c0_13 = arith.constant 0 : index
    %c0_14 = arith.constant 0 : index
    %20 = vector.load %arg7[%c0_12, %c0_13, %c0_14] : memref<1x64x128xbf16, #tpu.memory_space<vmem>>, vector<1x64x128xbf16>
    %21 = vector.shape_cast %20 : vector<1x64x128xbf16> to vector<64x128xbf16>
    %22 = vector.shape_cast %19 : vector<64x128xbf16> to vector<1x64x128xbf16>
    tpu.vector_store %arg7[%c0_12, %c0_13, %c0_14], %22 {strides = array<i32>} : memref<1x64x128xbf16, #tpu.memory_space<vmem>>, vector<1x64x128xbf16>,
    return
  }
  func.func @transform_0(%arg0: i32, %arg1: i32) -> (i32, i32, i32) {
    %c0_i32 = arith.constant 0 : i32
    %c0_i32_0 = arith.constant 0 : i32
    return %arg0, %arg1, %c0_i32 : i32, i32, i32
  }
  func.func @transform_1(%arg0: i32, %arg1: i32) -> (i32, i32) {
    %c0_i32 = arith.constant 0 : i32
    %c0_i32_0 = arith.constant 0 : i32
    %c0_i32_1 = arith.constant 0 : i32
    return %c0_i32, %c0_i32_0 : i32, i32
  }
  func.func @transform_2(%arg0: i32, %arg1: i32) -> (i32, i32) {
    %c0_i32 = arith.constant 0 : i32
    %c0_i32_0 = arith.constant 0 : i32
    %c0_i32_1 = arith.constant 0 : i32
    return %c0_i32, %c0_i32_0 : i32, i32
  }
  func.func @transform_3(%arg0: i32, %arg1: i32) -> (i32, i32, i32) {
    %c0_i32 = arith.constant 0 : i32
    %c0_i32_0 = arith.constant 0 : i32
    return %arg0, %arg1, %c0_i32 : i32, i32, i32
  }
  func.func @transform_4(%arg0: i32, %arg1: i32) -> (i32, i32, i32) {
    %c0_i32 = arith.constant 0 : i32
    %c0_i32_0 = arith.constant 0 : i32
    return %arg0, %arg1, %c0_i32 : i32, i32, i32
  }
  func.func @transform_5(%arg0: i32, %arg1: i32) -> (i32, i32, i32) {
    %c0_i32 = arith.constant 0 : i32
    %c0_i32_0 = arith.constant 0 : i32
    return %arg0, %arg1, %c0_i32 : i32, i32, i32
  }
}

</mosaic_0001>

<llo_original>
// kernel: tpu_custom_call.1
$region0: #{tpu_custom_call.1}
  #allocation0 [shape = 'u32[]', space=smem, size = 0x4, offset = 0x4, fixed_abs, tag = 'smem constant byte address 0x4 - core index']
  #allocation1 [shape = 'u32[144,128]{1,0:T(1,128)}', space=vmem, size = 0x12000, scoped, tag = 'internal scratch']
  %s0 = inlined_call_operand.vmem [shape: f32[2,256,32], index: 0, kind: input, shape index: {}]
  %s1 = inlined_call_operand.vmem [shape: bf16[32,384], index: 1, kind: input, shape index: {}]
  %s2 = inlined_call_operand.vmem [shape: f32[1,384], index: 2, kind: input, shape index: {}]
  %s3 = inlined_call_operand.hbm [shape: bf16[2,256,128], index: 3, kind: output, shape index: {0}]
  %s4 = inlined_call_operand.hbm [shape: bf16[2,256,128], index: 4, kind: output, shape index: {1}]
  %s5 = inlined_call_operand.hbm [shape: bf16[2,256,128], index: 5, kind: output, shape index: {2}]
  %6 = xla_tuple %s3, %s4, %s5
  %s7 = sld [smem:[#allocation0]]
  $region61: #{tpu_custom_call.1} parent=0
    _
  %s9 = ssub.s32 1, %s7
  %s10 = scalar_select 0, %s9, %s7
  $region1: #{tpu_custom_call.1} parent=0
    #allocation2 [shape = 'u8[32768]{0}', space=vmem, size = 0x8000, scoped, tag = 'output window, operand 0']
    #allocation3 [shape = 's32[2]{0}', space=sflag, size = 0x8, scoped, tag = 'scoped memory for tpu_custom_call.1']
    #allocation4 [shape = 'u8[32768]{0}', space=vmem, size = 0x8000, scoped, tag = 'output window, operand 1']
    #allocation5 [shape = 's32[2]{0}', space=sflag, size = 0x8, scoped, tag = 'scoped memory for tpu_custom_call.1']
    #allocation6 [shape = 'u8[32768]{0}', space=vmem, size = 0x8000, scoped, tag = 'output window, operand 2']
    %11 = vsyncpa [#allocation3], 0
    %s12 = scalar_lea.sflag [#allocation3], 1
    %13 = vsyncpa %s12, 0
    %14 = vsyncpa [#allocation5], 0
    %s15 = scalar_lea.sflag [#allocation5], 1
    %16 = vsyncpa %s15, 0
    loop: start=0, step=1, limit=10
    $region2: #{tpu_custom_call.1} parent=1 // loop_pre_header
      _
    $region3: #{tpu_custom_call.1} parent=1 // loop_header
      %s18 = sphi 0, %s22
      %p19 = scmp.ge.s32.totalorder %s18, 10
      %s25 = sphi 0, %s37
      %s26 = sphi 0, %s33
      %s27 = sphi 0, %s25
      %s28 = sphi 0, %s26
      %s29 = sphi 0, %s27
      %s30 = sphi 0, %s28
      %s42 = sphi 0, %s44
      %s45 = sphi 0, %s42
      %s46 = sphi 0, %s45
      %s62 = sphi 0, %s46
      %s66 = sphi 0, %s66
      %s68 = sphi 0, %s66
      %s69 = sphi 0, %s68
      %s83 = sphi 0, %s69
      %s87 = sphi 0, %s87
      %s89 = sphi 0, %s87
      %s90 = sphi 0, %s89
      %s104 = sphi 0, %s90
      %s112 = sphi 0, %s114
      %s115 = sphi 0, %s112
      %s116 = sphi 0, %s115
      %s132 = sphi 0, %s116
      %s140 = sphi 0, %s142
      %s143 = sphi 0, %s140
      %s144 = sphi 0, %s143
      %s160 = sphi 0, %s144
      %s168 = sphi 0, %s170
      %s171 = sphi 0, %s168
      %s172 = sphi 0, %s171
      %s188 = sphi 0, %s172
    $region4: #{tpu_custom_call.1} parent=1 // loop_header_branch
      %21 = sbr.rel (%p19) target = $region8
    $region5: #{tpu_custom_call.1} parent=1 // loop_body
      %s23 = ssub.s32 %s18, 1
      %s24 = ssub.s32 %s18, 2
      %s31 = sadd.s32 1, %s26
      %p32 = scmp.ge.s32.totalorder %s31, 4
      %s33 = scalar_select %p32, 0, %s31
      %s34 = sadd.s32 1, %s25
      %s35 = scalar_select %p32, %s34, %s25
      %p36 = scmp.ge.s32.totalorder %s35, 2
      %s37 = scalar_select %p36, 0, %s35
      %s38 = ssub.s32 %s25, %s37
      %s39 = ssub.s32 %s26, %s33
      %s40 = sor.u32 %s38, %s39
      %p41 = scmp.eq.s32.totalorder %s40, 0
      %s43 = sadd.s32 %s42, 1
      %s44 = scalar_select %p41, %s42, %s43
      %p47 = pneg %p41
      %p48 = scmp.eq.s32.totalorder %s18, 7
      %p49 = por %p47, %p48
      %p50 = scmp.ne.s32.totalorder %s42, %s45
      %p51 = scmp.eq.s32.totalorder %s18, 0
      %p52 = por %p50, %p51
      %p53 = scmp.ne.s32.totalorder %s42, %s45
      %p54 = scmp.eq.s32.totalorder %s23, 7
      %p55 = por %p53, %p54
      %p56 = scmp.ne.s32.totalorder %s45, %s46
      %p57 = scmp.eq.s32.totalorder %s23, 0
      %p58 = por %p56, %p57
      %p59 = scmp.ne.s32.totalorder %s45, %s46
      %p60 = scmp.eq.s32.totalorder %s24, 7
      %p61 = por %p59, %p60
      %p63 = scmp.ne.s32.totalorder %s46, %s62
      %p64 = scmp.eq.s32.totalorder %s24, 0
      %p65 = por %p63, %p64
      %s67 = sadd.s32 %s66, 1
      %p70 = scmp.eq.s32.totalorder %s18, 7
      %p71 = scmp.ne.s32.totalorder %s66, %s68
      %p72 = scmp.eq.s32.totalorder %s18, 0
      %p73 = por %p71, %p72
      %p74 = scmp.ne.s32.totalorder %s66, %s68
      %p75 = scmp.eq.s32.totalorder %s23, 7
      %p76 = por %p74, %p75
      %p77 = scmp.ne.s32.totalorder %s68, %s69
      %p78 = scmp.eq.s32.totalorder %s23, 0
      %p79 = por %p77, %p78
      %p80 = scmp.ne.s32.totalorder %s68, %s69
      %p81 = scmp.eq.s32.totalorder %s24, 7
      %p82 = por %p80, %p81
      %p84 = scmp.ne.s32.totalorder %s69, %s83
      %p85 = scmp.eq.s32.totalorder %s24, 0
      %p86 = por %p84, %p85
      %s88 = sadd.s32 %s87, 1
      %p91 = scmp.eq.s32.totalorder %s18, 7
      %p92 = scmp.ne.s32.totalorder %s87, %s89
      %p93 = scmp.eq.s32.totalorder %s18, 0
      %p94 = por %p92, %p93
      %p95 = scmp.ne.s32.totalorder %s87, %s89
      %p96 = scmp.eq.s32.totalorder %s23, 7
      %p97 = por %p95, %p96
      %p98 = scmp.ne.s32.totalorder %s89, %s90
      %p99 = scmp.eq.s32.totalorder %s23, 0
      %p100 = por %p98, %p99
      %p101 = scmp.ne.s32.totalorder %s89, %s90
      %p102 = scmp.eq.s32.totalorder %s24, 7
      %p103 = por %p101, %p102
      %p105 = scmp.ne.s32.totalorder %s90, %s104
      %p106 = scmp.eq.s32.totalorder %s24, 0
      %p107 = por %p105, %p106
      %s108 = ssub.s32 %s25, %s37
      %s109 = ssub.s32 %s26, %s33
      %s110 = sor.u32 %s108, %s109
      %p111 = scmp.eq.s32.totalorder %s110, 0
      %s113 = sadd.s32 %s112, 1
      %s114 = scalar_select %p111, %s112, %s113
      %p117 = pneg %p111
      %p118 = scmp.eq.s32.totalorder %s18, 7
      %p119 = por %p117, %p118
      %p120 = scmp.ne.s32.totalorder %s112, %s115
      %p121 = scmp.eq.s32.totalorder %s18, 0
      %p122 = por %p120, %p121
      %p123 = scmp.ne.s32.totalorder %s112, %s115
      %p124 = scmp.eq.s32.totalorder %s23, 7
      %p125 = por %p123, %p124
      %p126 = scmp.ne.s32.totalorder %s115, %s116
      %p127 = scmp.eq.s32.totalorder %s23, 0
      %p128 = por %p126, %p127
      %p129 = scmp.ne.s32.totalorder %s115, %s116
      %p130 = scmp.eq.s32.totalorder %s24, 7
      %p131 = por %p129, %p130
      %p133 = scmp.ne.s32.totalorder %s116, %s132
      %p134 = scmp.eq.s32.totalorder %s24, 0
      %p135 = por %p133, %p134
      %s136 = ssub.s32 %s25, %s37
      %s137 = ssub.s32 %s26, %s33
      %s138 = sor.u32 %s136, %s137
      %p139 = scmp.eq.s32.totalorder %s138, 0
      %s141 = sadd.s32 %s140, 1
      %s142 = scalar_select %p139, %s140, %s141
      %p145 = pneg %p139
      %p146 = scmp.eq.s32.totalorder %s18, 7
      %p147 = por %p145, %p146
      %p148 = scmp.ne.s32.totalorder %s140, %s143
      %p149 = scmp.eq.s32.totalorder %s18, 0
      %p150 = por %p148, %p149
      %p151 = scmp.ne.s32.totalorder %s140, %s143
      %p152 = scmp.eq.s32.totalorder %s23, 7
      %p153 = por %p151, %p152
      %p154 = scmp.ne.s32.totalorder %s143, %s144
      %p155 = scmp.eq.s32.totalorder %s23, 0
      %p156 = por %p154, %p155
      %p157 = scmp.ne.s32.totalorder %s143, %s144
      %p158 = scmp.eq.s32.totalorder %s24, 7
      %p159 = por %p157, %p158
      %p161 = scmp.ne.s32.totalorder %s144, %s160
      %p162 = scmp.eq.s32.totalorder %s24, 0
      %p163 = por %p161, %p162
      %s164 = ssub.s32 %s25, %s37
      %s165 = ssub.s32 %s26, %s33
      %s166 = sor.u32 %s164, %s165
      %p167 = scmp.eq.s32.totalorder %s166, 0
      %s169 = sadd.s32 %s168, 1
      %s170 = scalar_select %p167, %s168, %s169
      %p173 = pneg %p167
      %p174 = scmp.eq.s32.totalorder %s18, 7
      %p175 = por %p173, %p174
      %p176 = scmp.ne.s32.totalorder %s168, %s171
      %p177 = scmp.eq.s32.totalorder %s18, 0
      %p178 = por %p176, %p177
      %p179 = scmp.ne.s32.totalorder %s168, %s171
      %p180 = scmp.eq.s32.totalorder %s23, 7
      %p181 = por %p179, %p180
      %p182 = scmp.ne.s32.totalorder %s171, %s172
      %p183 = scmp.eq.s32.totalorder %s23, 0
      %p184 = por %p182, %p183
      %p185 = scmp.ne.s32.totalorder %s171, %s172
      %p186 = scmp.eq.s32.totalorder %s24, 7
      %p187 = por %p185, %p186
      %p189 = scmp.ne.s32.totalorder %s172, %s188
      %p190 = scmp.eq.s32.totalorder %s24, 0
      %p191 = por %p189, %p190
      %p192 = scmp.le.s32.totalorder 1, %s18
      %p193 = scmp.lt.s32.totalorder %s18, 9
      %p194 = pnand %p192, %p193
      %p195 = pneg %p194
      // Predicated region
      $region9: #{tpu_custom_call.1} parent=5 // pred_check
        _
      $region10: #{tpu_custom_call.1} parent=5 // pred_check_branch
        %197 = sbr.rel (%p194) target = $region12
      $region11: #{tpu_custom_call.1} parent=5 // pred_region
        %s198 = ssub.s32 %s18, 1
        // Predicated region
        $region13: #{tpu_custom_call.1} parent=11 // pred_check
          %p199 = pneg %p79
        $region14: #{tpu_custom_call.1} parent=11 // pred_check_branch
          %201 = sbr.rel (%p199) target = $region16
        $region15: #{tpu_custom_call.1} parent=11 // pred_region
          _
        $region16: #{tpu_custom_call.1} parent=11 // pred_fallthru
          _
        // Predicated region
        $region17: #{tpu_custom_call.1} parent=11 // pred_check
          %p202 = pneg %p100
        $region18: #{tpu_custom_call.1} parent=11 // pred_check_branch
          %204 = sbr.rel (%p202) target = $region20
        $region19: #{tpu_custom_call.1} parent=11 // pred_region
          _
        $region20: #{tpu_custom_call.1} parent=11 // pred_fallthru
          _
      $region12: #{tpu_custom_call.1} parent=5 // pred_fallthru
        _
      %p205 = scmp.lt.s32.totalorder %s18, 8
      // Predicated region
      $region21: #{tpu_custom_call.1} parent=5 // pred_check
        %p206 = pneg %p205
      $region22: #{tpu_custom_call.1} parent=5 // pred_check_branch
        %208 = sbr.rel (%p206) target = $region24
      $region23: #{tpu_custom_call.1} parent=5 // pred_region
        // Predicated region
        $region25: #{tpu_custom_call.1} parent=23 // pred_check
          %p209 = pneg %p52
        $region26: #{tpu_custom_call.1} parent=23 // pred_check_branch
          %211 = sbr.rel (%p209) target = $region28
        $region27: #{tpu_custom_call.1} parent=23 // pred_region
          %s212 = smul.u32 8, %s26
          %p213 = scmp.lt.s32.totalorder %s25, 1
          %s214 = scalar_select %p213, %s25, 1
          %p215 = scmp.lt.s32.totalorder %s212, 31
          %s216 = scalar_select %p215, %s212, 31
          %s217 = smul.addr %s214, 32
          %s218 = sadd.s32 %s216, %s217
          %s219 = smul.addr %s218, 8
          %s220 = scalar_lea.vmem %s0, %s219
          %s221 = smul.u32 8, %s26
        $region28: #{tpu_custom_call.1} parent=23 // pred_fallthru
          _
      $region24: #{tpu_custom_call.1} parent=5 // pred_fallthru
        _
      %p222 = scmp.le.s32.totalorder 1, %s18
      %p223 = scmp.lt.s32.totalorder %s18, 9
      %p224 = pnand %p222, %p223
      %p225 = pneg %p224
      // Predicated region
      $region29: #{tpu_custom_call.1} parent=5 // pred_check
        _
      $region30: #{tpu_custom_call.1} parent=5 // pred_check_branch
        %227 = sbr.rel (%p224) target = $region32
      $region31: #{tpu_custom_call.1} parent=5 // pred_region
        %s228 = ssub.s32 %s18, 1
        %s229 = smul.u32 8, %s28
        %p230 = scmp.lt.s32.totalorder %s27, 1
        %s231 = scalar_select %p230, %s27, 1
        %p232 = scmp.lt.s32.totalorder %s229, 31
        %s233 = scalar_select %p232, %s229, 31
        %s234 = smul.addr %s231, 32
        %s235 = sadd.s32 %s233, %s234
        %s236 = smul.addr %s235, 8
        %s237 = scalar_lea.vmem %s0, %s236
        %p238 = pneg %p58
        %p239 = pneg %p55
        %p240 = pneg %p79
        %p241 = pneg %p76
        %p242 = pneg %p100
        %p243 = pneg %p97
        %p244 = pneg %p128
        %p245 = pneg %p125
        %s246 = sand.u32 %s115, 1
        %s247 = scalar_lea.sflag [#allocation3], %s246
        %s248 = sand.u32 %s115, 1
        %s249 = smul.addr %s248, 32
        %s250 = scalar_lea.vmem [#allocation2], %s249
        %p251 = pneg %p156
        %p252 = pneg %p153
        %s253 = sand.u32 %s23, 1
        %s254 = scalar_lea.sflag [#allocation5], %s253
        %s255 = sand.u32 %s143, 1
        %s256 = smul.addr %s255, 32
        %s257 = scalar_lea.vmem [#allocation4], %s256
        %p258 = pneg %p184
        %p259 = pneg %p181
        %s260 = sand.u32 %s23, 1
        %s261 = scalar_lea.sflag [#allocation5], %s260
        %s262 = sand.u32 %s171, 1
        %s263 = smul.addr %s262, 32
        %s264 = scalar_lea.vmem [#allocation6], %s263
        %s265 = smul.u32 8, %s28
        %p266 = scmp.lt.s32.totalorder %s27, 1
        %s267 = scalar_select %p266, %s27, 1
        %p268 = scmp.lt.s32.totalorder %s265, 31
        %s269 = scalar_select %p268, %s265, 31
        %s270 = smul.addr %s267, 32
        %s271 = sadd.s32 %s269, %s270
        %s272 = smul.addr %s271, 8
        %s273 = scalar_lea.vmem %s0, %s272
        %s274 = smul.u32 8, %s28
        %s275 = smul.u32 8, %s28
        %s276 = smul.u32 8, %s28
        %s277 = smul.u32 8, %s28
        %v279 = vld [vmem:[%s273] sm:$0xff]
        %v280 = vld [vmem:[%s273 + $0x8] sm:$0xff]
        %v281 = vld [vmem:[%s273 + $0x10] sm:$0xff]
        %v282 = vld [vmem:[%s273 + $0x18] sm:$0xff]
        %v283 = vld [vmem:[%s273 + $0x20] sm:$0xff]
        %v284 = vld [vmem:[%s273 + $0x28] sm:$0xff]
        %v285 = vld [vmem:[%s273 + $0x30] sm:$0xff]
        %v286 = vld [vmem:[%s273 + $0x38] sm:$0xff]
        %v287 = vpack.c.bf16 %v280, %v279
        %v288 = vpack.c.bf16 %v282, %v281
        %v289 = vpack.c.bf16 %v284, %v283
        %v290 = vpack.c.bf16 %v286, %v285
        %v291 = vld [vmem:[%s1] sm:$0xff]
        %v292 = vld [vmem:[%s1 + $0x8] sm:$0xf]
        %v293 = vld [vmem:[%s1 + $0xc] sm:$0xff]
        %v294 = vld [vmem:[%s1 + $0x14] sm:$0xf]
        %v295 = vld [vmem:[%s1 + $0x18] sm:$0xff]
        %v296 = vld [vmem:[%s1 + $0x20] sm:$0xf]
        %v297 = vld [vmem:[%s1 + $0x24] sm:$0xff]
        %v298 = vld [vmem:[%s1 + $0x2c] sm:$0xf]
        %v299 = vld [vmem:[%s2] sm:$0x7]
        %v301 = vlaneseq
        %v302 = vshrl.u32 %v301, 7
        %v303 = vsub.s32 0, %v302
        %v304 = vrot.slane %v299, %v303
        %v305 = vlaneseq
        %v306 = vshrl.u32 %v305, 7
        %v307 = vsub.s32 1, %v306
        %v308 = vrot.slane %v299, %v307
        %v309 = vlaneseq
        %v310 = vshrl.u32 %v309, 7
        %v311 = vsub.s32 2, %v310
        %v312 = vrot.slane %v299, %v311
        %v324 = vunpack.c.l.b16 %v291
        %v325 = vunpack.c.h.b16 %v291
        %v326 = vunpack.c.l.b16 %v292
        %v327 = vunpack.c.l.b16 %v293
        %v328 = vunpack.c.h.b16 %v293
        %v329 = vunpack.c.l.b16 %v294
        %v330 = vunpack.c.l.b16 %v295
        %v331 = vunpack.c.h.b16 %v295
        %v332 = vunpack.c.l.b16 %v296
        %v333 = vunpack.c.l.b16 %v297
        %v334 = vunpack.c.h.b16 %v297
        %v335 = vunpack.c.l.b16 %v298
        %v336 = vpack.c.b16 %v327, %v324
        %v337 = vpack.c.b16 %v328, %v325
        %v338 = vpack.c.b16 %v329, %v326
        %v339 = vpack.c.b16 %v333, %v330
        %v340 = vpack.c.b16 %v334, %v331
        %v341 = vpack.c.b16 %v335, %v332
        %vm348 = vcmask 261120
        %v350 = vsel %vm348, %v287, 0
        %v353 = vsel %vm348, %v288, 0
        %v356 = vsel %vm348, %v289, 0
        %v359 = vsel %vm348, %v290, 0
        %361 = vmatprep.subr.bf16.mxu0 0
        %362 = vmatpush1.bf16.msra.mxu0 0
        %363 = vmatprep.subr.bf16.mxu0 0
        %364 = vmatpush1.bf16.msra.mxu0 0
        %365 = vmatprep.subr.bf16.mxu0 0
        %366 = vmatpush1.bf16.msra.mxu0 0
        %367 = vmatprep.subr.bf16.mxu0 0
        %368 = vmatpush1.bf16.msra.mxu0 0
        %369 = vmatprep.subr.bf16.mxu0 0
        %370 = vmatpush1.bf16.msra.mxu0 0
        %371 = vmatprep.subr.bf16.mxu0 0
        %372 = vmatpush1.bf16.msra.mxu0 0
        %373 = vmatprep.subr.bf16.mxu0 %v340
        %374 = vmatpush1.bf16.msra.mxu0 %v339
        %375 = vmatprep.subr.bf16.mxu0 %v337
        %376 = vmatpush1.bf16.msra.mxu0 %v336
        %377 = vmatprep.subr.bf16.mxu0 0
        %378 = vmatpush2.bf16.msra.mxu0 0
        %379 = vmatprep.subr.bf16.mxu0 0
        %380 = vmatpush2.bf16.msra.mxu0 0
        %381 = vmatprep.subr.bf16.mxu0 0
        %382 = vmatpush2.bf16.msra.mxu0 0
        %383 = vmatprep.subr.bf16.mxu0 0
        %384 = vmatpush2.bf16.msra.mxu0 0
        %385 = vmatprep.subr.bf16.mxu0 0
        %386 = vmatpush2.bf16.msra.mxu0 0
        %387 = vmatprep.subr.bf16.mxu0 0
        %388 = vmatpush2.bf16.msra.mxu0 0
        %389 = vmatprep.subr.bf16.mxu0 0
        %390 = vmatpush2.bf16.msra.mxu0 0
        %391 = vmatprep.subr.bf16.mxu0 0
        %392 = vmatpush2.bf16.msra.mxu0 0
        %393 = vmatprep.mubr.bf16.mxu0 0
        %394 = vmatmul.mubr.bf16.gmra.mxu0 %v350
        %v395 = vpop.f32.mrf.mxu0
        %v396 = vadd.f32 %v304, %v395
        %v397 = vpop.f32.mrf.mxu0
        %v398 = vadd.f32 %v308, %v397
        %v399 = vpop.f32.mrf.mxu0
        %v400 = vadd.f32 %v304, %v399
        %v401 = vpop.f32.mrf.mxu0
        %v402 = vadd.f32 %v308, %v401
        %403 = vmatprep.mubr.bf16.mxu0 0
        %404 = vmatmul.mubr.bf16.gmra.mxu0 %v353
        %v405 = vpop.f32.mrf.mxu0
        %v406 = vadd.f32 %v304, %v405
        %v407 = vpop.f32.mrf.mxu0
        %v408 = vadd.f32 %v308, %v407
        %v409 = vpop.f32.mrf.mxu0
        %v410 = vadd.f32 %v304, %v409
        %v411 = vpop.f32.mrf.mxu0
        %v412 = vadd.f32 %v308, %v411
        %413 = vmatprep.mubr.bf16.mxu0 0
        %414 = vmatmul.mubr.bf16.gmra.mxu0 %v356
        %v415 = vpop.f32.mrf.mxu0
        %v416 = vadd.f32 %v304, %v415
        %v417 = vpop.f32.mrf.mxu0
        %v418 = vadd.f32 %v308, %v417
        %v419 = vpop.f32.mrf.mxu0
        %v420 = vadd.f32 %v304, %v419
        %v421 = vpop.f32.mrf.mxu0
        %v422 = vadd.f32 %v308, %v421
        %423 = vmatprep.mubr.bf16.mxu0 0
        %424 = vmatmul.mubr.bf16.gmra.mxu0 %v359
        %v425 = vpop.f32.mrf.mxu0
        %v426 = vadd.f32 %v304, %v425
        %v427 = vpop.f32.mrf.mxu0
        %v428 = vadd.f32 %v308, %v427
        %v429 = vpop.f32.mrf.mxu0
        %v430 = vadd.f32 %v304, %v429
        %v431 = vpop.f32.mrf.mxu0
        %v432 = vadd.f32 %v308, %v431
        %433 = vdwg.mxu0
        %434 = vmatprep.subr.bf16.mxu0 0
        %435 = vmatpush1.bf16.msra.mxu0 0
        %436 = vmatprep.subr.bf16.mxu0 0
        %437 = vmatpush1.bf16.msra.mxu0 0
        %438 = vmatprep.subr.bf16.mxu0 0
        %439 = vmatpush1.bf16.msra.mxu0 0
        %440 = vmatprep.subr.bf16.mxu0 0
        %441 = vmatpush1.bf16.msra.mxu0 0
        %442 = vmatprep.subr.bf16.mxu0 0
        %443 = vmatpush1.bf16.msra.mxu0 0
        %444 = vmatprep.subr.bf16.mxu0 0
        %445 = vmatpush1.bf16.msra.mxu0 0
        %446 = vmatprep.subr.bf16.mxu0 0
        %447 = vmatpush1.bf16.msra.mxu0 %v341
        %448 = vmatprep.subr.bf16.mxu0 0
        %449 = vmatpush1.bf16.msra.mxu0 %v338
        %450 = vmatprep.subr.bf16.mxu0 0
        %451 = vmatpush2.bf16.msra.mxu0 0
        %452 = vmatprep.subr.bf16.mxu0 0
        %453 = vmatpush2.bf16.msra.mxu0 0
        %454 = vmatprep.subr.bf16.mxu0 0
        %455 = vmatpush2.bf16.msra.mxu0 0
        %456 = vmatprep.subr.bf16.mxu0 0
        %457 = vmatpush2.bf16.msra.mxu0 0
        %458 = vmatprep.subr.bf16.mxu0 0
        %459 = vmatpush2.bf16.msra.mxu0 0
        %460 = vmatprep.subr.bf16.mxu0 0
        %461 = vmatpush2.bf16.msra.mxu0 0
        %462 = vmatprep.subr.bf16.mxu0 0
        %463 = vmatpush2.bf16.msra.mxu0 0
        %464 = vmatprep.subr.bf16.mxu0 0
        %465 = vmatpush2.bf16.msra.mxu0 0
        %466 = vmatprep.mubr.bf16.mxu0 0
        %467 = vmatmul.mubr.bf16.gmra.mxu0 %v350
        %v468 = vpop.f32.mrf.mxu0
        %v469 = vadd.f32 %v312, %v468
        %v470 = vpop.f32.mrf.mxu0
        %v471 = vpop.f32.mrf.mxu0
        %v472 = vadd.f32 %v312, %v471
        %v473 = vpop.f32.mrf.mxu0
        %474 = vmatprep.mubr.bf16.mxu0 0
        %475 = vmatmul.mubr.bf16.gmra.mxu0 %v353
        %v476 = vpop.f32.mrf.mxu0
        %v477 = vadd.f32 %v312, %v476
        %v478 = vpop.f32.mrf.mxu0
        %v479 = vpop.f32.mrf.mxu0
        %v480 = vadd.f32 %v312, %v479
        %v481 = vpop.f32.mrf.mxu0
        %482 = vmatprep.mubr.bf16.mxu0 0
        %483 = vmatmul.mubr.bf16.gmra.mxu0 %v356
        %v484 = vpop.f32.mrf.mxu0
        %v485 = vadd.f32 %v312, %v484
        %v486 = vpop.f32.mrf.mxu0
        %v487 = vpop.f32.mrf.mxu0
        %v488 = vadd.f32 %v312, %v487
        %v489 = vpop.f32.mrf.mxu0
        %490 = vmatprep.mubr.bf16.mxu0 0
        %491 = vmatmul.mubr.bf16.gmra.mxu0 %v359
        %v492 = vpop.f32.mrf.mxu0
        %v493 = vadd.f32 %v312, %v492
        %v494 = vpop.f32.mrf.mxu0
        %v495 = vpop.f32.mrf.mxu0
        %v496 = vadd.f32 %v312, %v495
        %v497 = vpop.f32.mrf.mxu0
        %498 = vdwg.mxu0
        %v499 = vpack.c.bf16 %v400, %v396
        %v500 = vpack.c.bf16 %v410, %v406
        %v501 = vpack.c.bf16 %v420, %v416
        %v502 = vpack.c.bf16 %v430, %v426
        %v507 = vunpack.c.l.b16 %v499
        %v508 = vunpack.c.h.b16 %v499
        %v509 = vunpack.c.l.b16 %v500
        %v510 = vunpack.c.h.b16 %v500
        %v511 = vunpack.c.l.b16 %v501
        %v512 = vunpack.c.h.b16 %v501
        %v513 = vunpack.c.l.b16 %v502
        %v514 = vunpack.c.h.b16 %v502
        %v515 = vpack.c.b16 %v507, %v507
        %v516 = vpack.c.b16 %v508, %v508
        %v517 = vpack.c.b16 %v509, %v509
        %v518 = vpack.c.b16 %v510, %v510
        %v519 = vpack.c.b16 %v511, %v511
        %v520 = vpack.c.b16 %v512, %v512
        %v521 = vpack.c.b16 %v513, %v513
        %v522 = vpack.c.b16 %v514, %v514
        %531 = vst [vmem:[%s250] sm:$0xf] %v515
        %532 = vst [vmem:[%s250 + $0x4] sm:$0xf] %v516
        %533 = vst [vmem:[%s250 + $0x8] sm:$0xf] %v517
        %534 = vst [vmem:[%s250 + $0xc] sm:$0xf] %v518
        %535 = vst [vmem:[%s250 + $0x10] sm:$0xf] %v519
        %536 = vst [vmem:[%s250 + $0x14] sm:$0xf] %v520
        %537 = vst [vmem:[%s250 + $0x18] sm:$0xf] %v521
        %538 = vst [vmem:[%s250 + $0x1c] sm:$0xf] %v522
        %v539 = vpack.c.bf16 %v402, %v398
        %v540 = vpack.c.bf16 %v412, %v408
        %v541 = vpack.c.bf16 %v422, %v418
        %v542 = vpack.c.bf16 %v432, %v428
        %v547 = vunpack.c.l.b16 %v539
        %v548 = vunpack.c.h.b16 %v539
        %v549 = vunpack.c.l.b16 %v540
        %v550 = vunpack.c.h.b16 %v540
        %v551 = vunpack.c.l.b16 %v541
        %v552 = vunpack.c.h.b16 %v541
        %v553 = vunpack.c.l.b16 %v542
        %v554 = vunpack.c.h.b16 %v542
        %v555 = vpack.c.b16 %v547, %v547
        %v556 = vpack.c.b16 %v548, %v548
        %v557 = vpack.c.b16 %v549, %v549
        %v558 = vpack.c.b16 %v550, %v550
        %v559 = vpack.c.b16 %v551, %v551
        %v560 = vpack.c.b16 %v552, %v552
        %v561 = vpack.c.b16 %v553, %v553
        %v562 = vpack.c.b16 %v554, %v554
        %571 = vst [vmem:[%s257] sm:$0xf] %v555
        %572 = vst [vmem:[%s257 + $0x4] sm:$0xf] %v556
        %573 = vst [vmem:[%s257 + $0x8] sm:$0xf] %v557
        %574 = vst [vmem:[%s257 + $0xc] sm:$0xf] %v558
        %575 = vst [vmem:[%s257 + $0x10] sm:$0xf] %v559
        %576 = vst [vmem:[%s257 + $0x14] sm:$0xf] %v560
        %577 = vst [vmem:[%s257 + $0x18] sm:$0xf] %v561
        %578 = vst [vmem:[%s257 + $0x1c] sm:$0xf] %v562
        %v579 = vpack.c.bf16 %v472, %v469
        %v580 = vpack.c.bf16 %v480, %v477
        %v581 = vpack.c.bf16 %v488, %v485
        %v582 = vpack.c.bf16 %v496, %v493
        %v587 = vunpack.c.l.b16 %v579
        %v588 = vunpack.c.h.b16 %v579
        %v589 = vunpack.c.l.b16 %v580
        %v590 = vunpack.c.h.b16 %v580
        %v591 = vunpack.c.l.b16 %v581
        %v592 = vunpack.c.h.b16 %v581
        %v593 = vunpack.c.l.b16 %v582
        %v594 = vunpack.c.h.b16 %v582
        %v595 = vpack.c.b16 %v587, %v587
        %v596 = vpack.c.b16 %v588, %v588
        %v597 = vpack.c.b16 %v589, %v589
        %v598 = vpack.c.b16 %v590, %v590
        %v599 = vpack.c.b16 %v591, %v591
        %v600 = vpack.c.b16 %v592, %v592
        %v601 = vpack.c.b16 %v593, %v593
        %v602 = vpack.c.b16 %v594, %v594
        %611 = vst [vmem:[%s264] sm:$0xf] %v595
        %612 = vst [vmem:[%s264 + $0x4] sm:$0xf] %v596
        %613 = vst [vmem:[%s264 + $0x8] sm:$0xf] %v597
        %614 = vst [vmem:[%s264 + $0xc] sm:$0xf] %v598
        %615 = vst [vmem:[%s264 + $0x10] sm:$0xf] %v599
        %616 = vst [vmem:[%s264 + $0x14] sm:$0xf] %v600
        %617 = vst [vmem:[%s264 + $0x18] sm:$0xf] %v601
        %618 = vst [vmem:[%s264 + $0x1c] sm:$0xf] %v602
        %s619 = sand.u32 %s115, 1
        %s620 = scalar_lea.sflag [#allocation3], %s619
        %s621 = sand.u32 %s115, 1
        %s622 = smul.addr %s621, 32
        %s623 = scalar_lea.vmem [#allocation2], %s622
        %s624 = sand.u32 %s23, 1
        %s625 = scalar_lea.sflag [#allocation5], %s624
        %s626 = sand.u32 %s143, 1
        %s627 = smul.addr %s626, 32
        %s628 = scalar_lea.vmem [#allocation4], %s627
        %s629 = sand.u32 %s23, 1
        %s630 = scalar_lea.sflag [#allocation5], %s629
        %s631 = sand.u32 %s171, 1
        %s632 = smul.addr %s631, 32
        %s633 = scalar_lea.vmem [#allocation6], %s632
        // Predicated region
        $region33: #{tpu_custom_call.1} parent=31 // pred_check
          %p634 = pneg %p125
        $region34: #{tpu_custom_call.1} parent=31 // pred_check_branch
          %636 = sbr.rel (%p634) target = $region36
        $region35: #{tpu_custom_call.1} parent=31 // pred_region
          %s637 = smul.u32 8, %s28
          %s639 = ssub.s32 512, 512
          %640 = vsyncadd %s620, %s639
          %s641 = smul.addr %s27, 32
          %s642 = sadd.s32 %s637, %s641
          %s643 = smul.addr %s642, 64
          %s644 = scalar_lea.hbm %s3, %s643
          %s645 = sshll.u32 %s623, 4
          %s646 = int_to_ptr.vmem [resolvable:$true] %s645
          %651 = dma.vmem_to_hbm [thread:$0]  %s646, 512, %s644, %s620, 64, 64, 4
        $region36: #{tpu_custom_call.1} parent=31 // pred_fallthru
          _
        // Predicated region
        $region37: #{tpu_custom_call.1} parent=31 // pred_check
          %p652 = pneg %p153
        $region38: #{tpu_custom_call.1} parent=31 // pred_check_branch
          %654 = sbr.rel (%p652) target = $region40
        $region39: #{tpu_custom_call.1} parent=31 // pred_region
          %s655 = smul.u32 8, %s28
          %s657 = ssub.s32 512, 512
          %658 = vsyncadd %s625, %s657
          %s659 = smul.addr %s27, 32
          %s660 = sadd.s32 %s655, %s659
          %s661 = smul.addr %s660, 64
          %s662 = scalar_lea.hbm %s4, %s661
          %s663 = sshll.u32 %s628, 4
          %s664 = int_to_ptr.vmem [resolvable:$true] %s663
          %669 = dma.vmem_to_hbm [thread:$0]  %s664, 512, %s662, %s625, 64, 64, 4
        $region40: #{tpu_custom_call.1} parent=31 // pred_fallthru
          _
        // Predicated region
        $region41: #{tpu_custom_call.1} parent=31 // pred_check
          %p670 = pneg %p181
        $region42: #{tpu_custom_call.1} parent=31 // pred_check_branch
          %672 = sbr.rel (%p670) target = $region44
        $region43: #{tpu_custom_call.1} parent=31 // pred_region
          %s673 = smul.u32 8, %s28
          %s675 = ssub.s32 512, 512
          %676 = vsyncadd %s630, %s675
          %s677 = smul.addr %s27, 32
          %s678 = sadd.s32 %s673, %s677
          %s679 = smul.addr %s678, 64
          %s680 = scalar_lea.hbm %s5, %s679
          %s681 = sshll.u32 %s633, 4
          %s682 = int_to_ptr.vmem [resolvable:$true] %s681
          %687 = dma.vmem_to_hbm [thread:$0]  %s682, 512, %s680, %s630, 64, 64, 4
        $region44: #{tpu_custom_call.1} parent=31 // pred_fallthru
          _
      $region32: #{tpu_custom_call.1} parent=5 // pred_fallthru
        _
      %p688 = scmp.le.s32.totalorder 2, %s18
      // Predicated region
      $region45: #{tpu_custom_call.1} parent=5 // pred_check
        %p689 = pneg %p688
      $region46: #{tpu_custom_call.1} parent=5 // pred_check_branch
        %691 = sbr.rel (%p689) target = $region48
      $region47: #{tpu_custom_call.1} parent=5 // pred_region
        %s692 = ssub.s32 %s18, 2
        // Predicated region
        $region49: #{tpu_custom_call.1} parent=47 // pred_check
          %p693 = pneg %p131
        $region50: #{tpu_custom_call.1} parent=47 // pred_check_branch
          %695 = sbr.rel (%p693) target = $region52
        $region51: #{tpu_custom_call.1} parent=47 // pred_region
          %s696 = sand.u32 %s116, 1
          %s697 = scalar_lea.sflag [#allocation3], %s696
          %s698 = sand.u32 %s116, 1
          %s699 = smul.addr %s698, 32
          %s700 = scalar_lea.vmem [#allocation2], %s699
          %701 = dma.done %s697, 512
        $region52: #{tpu_custom_call.1} parent=47 // pred_fallthru
          _
        // Predicated region
        $region53: #{tpu_custom_call.1} parent=47 // pred_check
          %p702 = pneg %p159
        $region54: #{tpu_custom_call.1} parent=47 // pred_check_branch
          %704 = sbr.rel (%p702) target = $region56
        $region55: #{tpu_custom_call.1} parent=47 // pred_region
          %s705 = sand.u32 %s24, 1
          %s706 = scalar_lea.sflag [#allocation5], %s705
          %s707 = sand.u32 %s144, 1
          %s708 = smul.addr %s707, 32
          %s709 = scalar_lea.vmem [#allocation4], %s708
          %710 = dma.done %s706, 512
        $region56: #{tpu_custom_call.1} parent=47 // pred_fallthru
          _
        // Predicated region
        $region57: #{tpu_custom_call.1} parent=47 // pred_check
          %p711 = pneg %p187
        $region58: #{tpu_custom_call.1} parent=47 // pred_check_branch
          %713 = sbr.rel (%p711) target = $region60
        $region59: #{tpu_custom_call.1} parent=47 // pred_region
          %s714 = sand.u32 %s24, 1
          %s715 = scalar_lea.sflag [#allocation5], %s714
          %s716 = sand.u32 %s172, 1
          %s717 = smul.addr %s716, 32
          %s718 = scalar_lea.vmem [#allocation6], %s717
          %719 = dma.done %s715, 512
        $region60: #{tpu_custom_call.1} parent=47 // pred_fallthru
          _
      $region48: #{tpu_custom_call.1} parent=5 // pred_fallthru
        _
    $region6: #{tpu_custom_call.1} parent=1 // loop_footer
      %s22 = sadd.s32 1, %s18
    $region7: #{tpu_custom_call.1} parent=1 // loop_footer_branch
      %17 = sbr.rel target = $region3
    $region8: #{tpu_custom_call.1} parent=1 // loop_exit
      _
    %720 = vsyncpa [#allocation3], 1
    %s721 = scalar_lea.sflag [#allocation3], 1
    %722 = vsyncpa %s721, 1
    %723 = vsyncpa [#allocation5], 1
    %s724 = scalar_lea.sflag [#allocation5], 1
    %725 = vsyncpa %s724, 1

</llo_original>
